<compile_context>
chip_gen: v5e
topology: v5e:2x2
jax: 0.10.0
libtpu: 0.0.40
codegen_flags: <defaults>
</compile_context>

<pallas_src>
import jax
import jax.numpy as jnp
from jax import lax
from jax.experimental import pallas as pl
from jax.experimental.pallas import tpu as pltpu


def _round_up(n: int, m: int) -> int:
    return ((n + m - 1) // m) * m


def _hnn_linear_kernel(x_ref, w_ref, b_ref, o_ref):
    # x_ref: (TM, D)  tile of samples (streamed, double-buffered)
    # w_ref: (D, D)   PyTorch (out, in) weight, VMEM-resident across all steps
    # b_ref: (D, 1)   bias column, VMEM-resident
    # o_ref: (1, 1, TM) lane-dense per-sample Hamiltonian values
    #
    # y^T = W @ x^T, computed with contraction on the last dim of BOTH operands
    # (trans_b MXU path -> no materialized transpose of W or x).
    yt = lax.dot_general(
        w_ref[...], x_ref[...],
        dimension_numbers=(((1,), (1,)), ((), ())),
        preferred_element_type=jnp.float32,
    )                                               # (D, TM), f32 accumulate
    yt = yt + b_ref[...]                            # bias broadcast along lanes
    h = jnp.sum(yt * yt, axis=0, keepdims=True)     # (1, TM)  -- lane-dense row
    o_ref[...] = h[None]                            # (1, 1, TM)


def hnn_linear_forward(x, w, b, *, block_rows=512):
    """H(x) = sum((x @ W^T + b)^2, -1, keepdims=True) via a Pallas TPU kernel.

    x: (B, D) float32; w: (D, D) float32 in PyTorch (out, in) layout; b: (D,) float32.
    Returns (B, 1) float32.
    """
    B, D = x.shape
    # Big tiles amortize the ~0.35 us/step overhead; small batches get a single
    # tile rounded up to the 8-sublane granule.
    TM = min(block_rows, _round_up(B, 8))
    B_pad = _round_up(B, TM)
    if B_pad != B:
        x = jnp.pad(x, ((0, B_pad - B), (0, 0)))    # padded rows sliced off below
    num_tiles = B_pad // TM
    b_col = b.reshape(D, 1).astype(jnp.float32)

    out = pl.pallas_call(
        _hnn_linear_kernel,
        out_shape=jax.ShapeDtypeStruct((num_tiles, 1, TM), jnp.float32),
        grid_spec=pl.GridSpec(
            grid=(num_tiles,),
            in_specs=[
                pl.BlockSpec((TM, D), lambda i: (i, 0)),   # stream x tiles
                pl.BlockSpec((D, D), lambda i: (0, 0)),    # W resident in VMEM
                pl.BlockSpec((D, 1), lambda i: (0, 0)),    # bias resident in VMEM
            ],
            out_specs=pl.BlockSpec((1, 1, TM), lambda i: (i, 0, 0)),
        ),
        compiler_params=pltpu.CompilerParams(
            # Independent batch tiles -> shard grid steps across TCs (v7x megacore).
            dimension_semantics=("parallel",),
        ),
    )(x, w, b_col)

    # (num_tiles, 1, TM) -> (B_pad, 1) -> drop padded rows.
    return out.reshape(B_pad, 1)[:B]


if __name__ == "__main__":
    key = jax.random.PRNGKey(0)
    kx, kw, kb = jax.random.split(key, 3)

    batch = 8
    dim = 32  # latent dimension of HNNLinear

    # Deterministic parameter init (PyTorch nn.Linear-style uniform bound 1/sqrt(dim)).
    bound = 1.0 / jnp.sqrt(jnp.float32(dim))
    w = jax.random.uniform(kw, (dim, dim), jnp.float32, -bound, bound)  # (out, in)
    b = jax.random.uniform(kb, (dim,), jnp.float32, -bound, bound)
    x = jax.random.normal(kx, (batch, dim), jnp.float32)

    out = jax.block_until_ready(hnn_linear_forward(x, w, b))

    # Pure-JAX reference check of the forward semantics.
    ref = jnp.sum((x @ w.T + b) ** 2, axis=-1, keepdims=True)
    assert out.shape == (batch, 1)
    assert jnp.allclose(out, ref, rtol=1e-5, atol=1e-5)

    # TODO(synk): vector_field / vector_field_jacobian rely on torch.autograd; in JAX
    # use jax.grad / jax.jacfwd over this forward instead of a hand-written kernel.
    print("KERNEL_OK")
</pallas_src>

<mosaic_0001>
module attributes {stable_mosaic.version = 11 : i64} {
  func.func @_hnn_linear_kernel(%arg0: i32, %arg1: memref<8x32xf32, #tpu.memory_space<vmem>>, %arg2: memref<32x32xf32, #tpu.memory_space<vmem>>, %arg3: memref<32x1xf32, #tpu.memory_space<vmem>>, %arg4: memref<1x1x8xf32, #tpu.memory_space<vmem>>) attributes {dimension_semantics = [#tpu.dimension_semantics<parallel>], iteration_bounds = array<i64: 1>, scalar_prefetch = 0 : i64, scratch_operands = 0 : i64, tpu.core_type = #tpu.core_type<tc>, window_params = [{transform_indices = @transform_0, window_bounds = array<i64: 8, 32>}, {pipeline_mode = #tpu.pipeline_mode<synchronous>, transform_indices = @transform_1, window_bounds = array<i64: 32, 32>}, {pipeline_mode = #tpu.pipeline_mode<synchronous>, transform_indices = @transform_2, window_bounds = array<i64: 32, 1>}, {transform_indices = @transform_3, window_bounds = array<i64: 1, 1, 8>}]} {
    %c0 = arith.constant 0 : index
    %c0_0 = arith.constant 0 : index
    %0 = vector.load %arg2[%c0, %c0_0] : memref<32x32xf32, #tpu.memory_space<vmem>>, vector<32x32xf32>
    %c0_1 = arith.constant 0 : index
    %c0_2 = arith.constant 0 : index
    %1 = vector.load %arg1[%c0_1, %c0_2] : memref<8x32xf32, #tpu.memory_space<vmem>>, vector<8x32xf32>
    %cst = arith.constant dense<0.000000e+00> : vector<32x8xf32>
    %2 = tpu.matmul %0, %1, %cst {dimension_numbers = #tpu.dot_dimension_numbers<[1], [1], [0], [0], [0, 0, 1, 0], [], []>} : vector<32x32xf32>, vector<8x32xf32>, vector<32x8xf32> -> vector<32x8xf32>
    %c0_3 = arith.constant 0 : index
    %c0_4 = arith.constant 0 : index
    %3 = vector.load %arg3[%c0_3, %c0_4] : memref<32x1xf32, #tpu.memory_space<vmem>>, vector<32x1xf32>
    %4 = vector.broadcast %3 : vector<32x1xf32> to vector<32x8xf32>
    %5 = arith.addf %2, %4 : vector<32x8xf32>
    %6 = arith.mulf %5, %5 : vector<32x8xf32>
    %cst_5 = arith.constant dense<0.000000e+00> : vector<8xf32>
    %7 = vector.multi_reduction <add>, %6, %cst_5 [0] : vector<32x8xf32> to vector<8xf32>
    %8 = vector.shape_cast %7 : vector<8xf32> to vector<1x8xf32>
    %9 = vector.shape_cast %8 : vector<1x8xf32> to vector<1x1x8xf32>
    %c0_6 = arith.constant 0 : index
    %c0_7 = arith.constant 0 : index
    %c0_8 = arith.constant 0 : index
    %10 = vector.load %arg4[%c0_6, %c0_7, %c0_8] : memref<1x1x8xf32, #tpu.memory_space<vmem>>, vector<1x1x8xf32>
    tpu.vector_store %arg4[%c0_6, %c0_7, %c0_8], %9 {strides = array<i32>} : memref<1x1x8xf32, #tpu.memory_space<vmem>>, vector<1x1x8xf32>,
    return
  }
  func.func @transform_0(%arg0: i32) -> (i32, i32) {
    %c0_i32 = arith.constant 0 : i32
    %c0_i32_0 = arith.constant 0 : i32
    return %arg0, %c0_i32 : i32, i32
  }
  func.func @transform_1(%arg0: i32) -> (i32, i32) {
    %c0_i32 = arith.constant 0 : i32
    %c0_i32_0 = arith.constant 0 : i32
    %c0_i32_1 = arith.constant 0 : i32
    return %c0_i32, %c0_i32_0 : i32, i32
  }
  func.func @transform_2(%arg0: i32) -> (i32, i32) {
    %c0_i32 = arith.constant 0 : i32
    %c0_i32_0 = arith.constant 0 : i32
    %c0_i32_1 = arith.constant 0 : i32
    return %c0_i32, %c0_i32_0 : i32, i32
  }
  func.func @transform_3(%arg0: i32) -> (i32, i32, i32) {
    %c0_i32 = arith.constant 0 : i32
    %c0_i32_0 = arith.constant 0 : i32
    %c0_i32_1 = arith.constant 0 : i32
    return %arg0, %c0_i32, %c0_i32_0 : i32, i32, i32
  }
}

</mosaic_0001>

<llo_original>
// kernel: tpu_custom_call.1
$region0: #{tpu_custom_call.1}
  #allocation0 [shape = 'u32[]', space=smem, size = 0x4, offset = 0x4, fixed_abs, tag = 'smem constant byte address 0x4 - core index']
  #allocation1 [shape = 'u32[72,128]{1,0:T(1,128)}', space=vmem, size = 0x9000, scoped, tag = 'internal scratch']
  %s0 = inlined_call_operand.hbm [shape: f32[8,32], index: 0, kind: input, shape index: {}]
  %s1 = inlined_call_operand.vmem [shape: f32[32,32], index: 1, kind: input, shape index: {}]
  %s2 = inlined_call_operand.vmem [shape: f32[32,1], index: 2, kind: input, shape index: {}]
  %s3 = inlined_call_operand.hbm [shape: f32[1,1,8], index: 3, kind: output, shape index: {}]
  %s4 = sld [smem:[#allocation0]]
  $region26: #{tpu_custom_call.1} parent=0
    _
  %s6 = ssub.s32 1, %s4
  %s7 = scalar_select 0, %s6, %s4
  $region1: #{tpu_custom_call.1} parent=0
    #allocation2 [shape = 'u8[4096]{0}', space=vmem, size = 0x1000, scoped, tag = 'input window, operand 0, single buffered']
    #allocation3 [shape = 's32[1]{0}', space=sflag, size = 0x4, scoped, tag = 'scoped memory for tpu_custom_call.1']
    #allocation4 [shape = 's32[1]{0}', space=sflag, size = 0x4, scoped, tag = 'scoped memory for tpu_custom_call.1']
    #allocation5 [shape = 'u8[512]{0}', space=vmem, size = 0x400, scoped, tag = 'output window, operand 0, single buffered']
    %8 = vsyncpa [#allocation3], 0
    %9 = vsyncpa [#allocation4], 0
    // Predicated region
    $region2: #{tpu_custom_call.1} parent=1 // pred_check
      _
    $region3: #{tpu_custom_call.1} parent=1 // pred_check_branch
      %11 = sbr.rel (0) target = $region5
    $region4: #{tpu_custom_call.1} parent=1 // pred_region
      %13 = vsyncadd [#allocation3], 0
      %s15 = sshll.u32 %s0, 4
      %s16 = int_to_ptr.hbm [resolvable:$true] %s15
      %s17 = sshll.u32 [#allocation2], 4
      %s18 = int_to_ptr.vmem [resolvable:$true] %s17
      %20 = dma.hbm_to_vmem [thread:$0]  %s16, 128, %s18, [#allocation3]
    $region5: #{tpu_custom_call.1} parent=1 // pred_fallthru
      _
    // Predicated region
    $region6: #{tpu_custom_call.1} parent=1 // pred_check
      _
    $region7: #{tpu_custom_call.1} parent=1 // pred_check_branch
      %22 = sbr.rel (0) target = $region9
    $region8: #{tpu_custom_call.1} parent=1 // pred_region
      _
    $region9: #{tpu_custom_call.1} parent=1 // pred_fallthru
      _
    // Predicated region
    $region10: #{tpu_custom_call.1} parent=1 // pred_check
      _
    $region11: #{tpu_custom_call.1} parent=1 // pred_check_branch
      %24 = sbr.rel (0) target = $region13
    $region12: #{tpu_custom_call.1} parent=1 // pred_region
      _
    $region13: #{tpu_custom_call.1} parent=1 // pred_fallthru
      _
    // Predicated region
    $region14: #{tpu_custom_call.1} parent=1 // pred_check
      _
    $region15: #{tpu_custom_call.1} parent=1 // pred_check_branch
      %26 = sbr.rel (0) target = $region17
    $region16: #{tpu_custom_call.1} parent=1 // pred_region
      %28 = dma.done [#allocation3], 128
    $region17: #{tpu_custom_call.1} parent=1 // pred_fallthru
      _
    %v29 = vld [vmem:[%s1] sm:$0xff]
    %v30 = vld [vmem:[%s1 + $0x8] sm:$0xff]
    %v31 = vld [vmem:[%s1 + $0x10] sm:$0xff]
    %v32 = vld [vmem:[%s1 + $0x18] sm:$0xff]
    %v33 = vld [vmem:[#allocation2] sm:$0xff]
    %v34 = vld [vmem:[%s2] sm:$0xff]
    %v35 = vld [vmem:[%s2 + $0x8] sm:$0xff]
    %v36 = vld [vmem:[%s2 + $0x10] sm:$0xff]
    %v37 = vld [vmem:[%s2 + $0x18] sm:$0xff]
    %39 = vset.pattern.permute.xlu0 0
    %40 = vperm.xlu0 %39, %v34
    %v41 = vpop.permute.xlu0 %40
    %44 = vset.pattern.permute.xlu0 0
    %45 = vperm.xlu0 %44, %v35
    %v46 = vpop.permute.xlu0 %45
    %49 = vset.pattern.permute.xlu0 0
    %50 = vperm.xlu0 %49, %v36
    %v51 = vpop.permute.xlu0 %50
    %54 = vset.pattern.permute.xlu0 0
    %55 = vperm.xlu0 %54, %v37
    %v56 = vpop.permute.xlu0 %55
    %vm58 = vcmask 261120
    %v60 = vsel %vm58, %v29, 0
    %v63 = vsel %vm58, %v30, 0
    %v66 = vsel %vm58, %v31, 0
    %v69 = vsel %vm58, %v32, 0
    %v72 = vsel %vm58, %v33, 0
    %74 = vmatpush.xpose.msra.mxu0 0.0
    %75 = vmatpush.xpose.msra.mxu0 0.0
    %76 = vmatpush.xpose.msra.mxu0 0.0
    %77 = vmatpush.xpose.msra.mxu0 0.0
    %78 = vmatpush.xpose.msra.mxu0 0.0
    %79 = vmatpush.xpose.msra.mxu0 0.0
    %80 = vmatpush.xpose.msra.mxu0 0.0
    %81 = vmatpush.xpose.msra.mxu0 0.0
    %82 = vmatpush.xpose.msra.mxu0 0.0
    %83 = vmatpush.xpose.msra.mxu0 0.0
    %84 = vmatpush.xpose.msra.mxu0 0.0
    %85 = vmatpush.xpose.msra.mxu0 0.0
    %86 = vmatpush.xpose.msra.mxu0 0.0
    %87 = vmatpush.xpose.msra.mxu0 0.0
    %88 = vmatpush.xpose.msra.mxu0 0.0
    %89 = vmatpush.xpose.msra.mxu0 %v72
    %90 = vmatmul.f32.gmra.mxu0 %v60
    %v91 = vpop.f32.mrf.mxu0
    %v92 = vadd.f32 %v41, %v91
    %93 = vmatmul.f32.gmra.mxu0 %v63
    %v94 = vpop.f32.mrf.mxu0
    %v95 = vadd.f32 %v46, %v94
    %96 = vmatmul.f32.gmra.mxu0 %v66
    %v97 = vpop.f32.mrf.mxu0
    %v98 = vadd.f32 %v51, %v97
    %99 = vmatmul.f32.gmra.mxu0 %v69
    %v100 = vpop.f32.mrf.mxu0
    %v101 = vadd.f32 %v56, %v100
    %102 = vdwg.mxu0
    %v103 = vmul.f32 %v92, %v92
    %v104 = vmul.f32 %v95, %v95
    %v105 = vmul.f32 %v98, %v98
    %v106 = vmul.f32 %v101, %v101
    %vm107 = vcmask 64512
    %v108 = vsel %vm107, %v103, 0.0
    %v109 = vsel %vm107, %v104, 0.0
    %v110 = vadd.f32 %v108, %v109
    %v111 = vsel %vm107, %v105, 0.0
    %v112 = vadd.f32 %v110, %v111
    %v113 = vsel %vm107, %v106, 0.0
    %v114 = vadd.f32 %v112, %v113
    %v115 = vrot.slane %v114, 4
    %v116 = vadd.f32 %v114, %v115
    %v117 = vrot.slane %v116, 2
    %v118 = vadd.f32 %v116, %v117
    %v119 = vrot.slane %v118, 1
    %v120 = vadd.f32 %v118, %v119
    %vm121 = vcmask 57344
    %122 = vst.msk [vmem:[#allocation5] sm:$0x1] %vm121, %v120
    // Predicated region
    $region18: #{tpu_custom_call.1} parent=1 // pred_check
      _
    $region19: #{tpu_custom_call.1} parent=1 // pred_check_branch
      %124 = sbr.rel (0) target = $region21
    $region20: #{tpu_custom_call.1} parent=1 // pred_region
      %126 = vsyncadd [#allocation4], 0
      %s128 = sshll.u32 [#allocation5], 4
      %s129 = int_to_ptr.vmem [resolvable:$true] %s128
      %s130 = sshll.u32 %s3, 4
      %s131 = int_to_ptr.hbm [resolvable:$true] %s130
      %133 = dma.vmem_to_hbm [thread:$0]  %s129, 16, %s131, [#allocation4]
    $region21: #{tpu_custom_call.1} parent=1 // pred_fallthru
      _
    // Predicated region
    $region22: #{tpu_custom_call.1} parent=1 // pred_check
      _
    $region23: #{tpu_custom_call.1} parent=1 // pred_check_branch
      %135 = sbr.rel (0) target = $region25
    $region24: #{tpu_custom_call.1} parent=1 // pred_region
      %137 = dma.done [#allocation4], 16
    $region25: #{tpu_custom_call.1} parent=1 // pred_fallthru
      _
    %138 = vsyncpa [#allocation3], 1
    %139 = vsyncpa [#allocation4], 1

</llo_original>
